<compile_context>
chip_gen: v7x
topology: tpu7x:2x2x1
jax: 0.10.0
libtpu: 0.0.40
codegen_flags: <defaults>
</compile_context>

<pallas_src>
import functools

import jax
import jax.numpy as jnp
from jax.experimental import pallas as pl
from jax.experimental.pallas import tpu as pltpu


def _round_up(x, m):
    return ((x + m - 1) // m) * m


def _largest_dividing_tile(total, desired, quantum=128):
    """Largest multiple of `quantum` that divides `total` and is <= desired."""
    units = max(1, total // quantum)
    desired_units = max(1, desired // quantum)
    best = 1
    d = 1
    while d * d <= units:
        if units % d == 0:
            for cand in (d, units // d):
                if best < cand <= desired_units:
                    best = cand
        d += 1
    return best * quantum


def _vmem_cap_bytes():
    """Physical VMEM of the attached chip (fallback: v7x's 64 MiB per TC)."""
    try:
        return int(pltpu.get_tpu_info().vmem_capacity_bytes)
    except Exception:
        return 64 * 1024 * 1024


# ----------------------------- kernels ---------------------------------------

def _matmul_single_k_kernel(precision, x_ref, w_ref, o_ref):
    # x_ref: (tm, Fp), w_ref: (Fp, tn), o_ref: (tm, tn). One MXU pass per block.
    o_ref[...] = jnp.dot(
        x_ref[...], w_ref[...],
        preferred_element_type=jnp.float32, precision=precision,
    ).astype(o_ref.dtype)


def _matmul_acc_out_kernel(precision, x_ref, w_ref, o_ref):
    # Tiled-K path, f32 output: accumulate straight into the resident o block.
    @pl.when(pl.program_id(2) == 0)
    def _():
        o_ref[...] = jnp.zeros_like(o_ref)

    o_ref[...] += jnp.dot(
        x_ref[...], w_ref[...],
        preferred_element_type=jnp.float32, precision=precision,
    )


def _matmul_acc_scratch_kernel(precision, x_ref, w_ref, o_ref, acc_ref):
    # Tiled-K path, non-f32 output: f32 VMEM accumulator, cast at the last k.
    @pl.when(pl.program_id(2) == 0)
    def _():
        acc_ref[...] = jnp.zeros_like(acc_ref)

    acc_ref[...] += jnp.dot(
        x_ref[...], w_ref[...],
        preferred_element_type=jnp.float32, precision=precision,
    )

    @pl.when(pl.program_id(2) == pl.num_programs(2) - 1)
    def _():
        o_ref[...] = acc_ref[...].astype(o_ref.dtype)


# --------------------------- wrapper API --------------------------------------

def prepare_memory_bank(mem, compute_dtype=None):
    """One-time bank prep: cast FIRST (halves bytes for bf16), then (F, C) + pad.

    Call once per bank update and cache the result; the forward pass then
    streams a layout-ready (Fp, Cp) bank with no per-call transpose/pad/cast.
    """
    compute_dtype = jnp.dtype(compute_dtype or mem.dtype)
    w = mem.astype(compute_dtype).T          # (F, C): classes on the lane axis
    F, C = w.shape
    Fp, Cp = _round_up(F, 128), _round_up(C, 128)
    if (Fp, Cp) != (F, C):
        # K-padding must be zeros (contraction); C-padding only lands in
        # output columns that are sliced off.
        w = jnp.pad(w, ((0, Fp - F), (0, Cp - C)))
    return w


def memory_forward_prepared(inputs, w_prepared, num_classes, *,
                            tm=None, tn=1024, tk=None,
                            out_dtype=None, precision=None,
                            w_buffer_count=None):
    """logits = inputs @ mem.T with a pre-prepared (Fp, Cp) bank."""
    B, F = inputs.shape
    Fp, Cp = w_prepared.shape
    C = int(num_classes)
    assert Fp >= F and Fp % 128 == 0 and Cp % 128 == 0 and Cp >= C

    compute_dtype = jnp.dtype(w_prepared.dtype)
    out_dtype = jnp.dtype(out_dtype or inputs.dtype)
    item = compute_dtype.itemsize
    out_item = out_dtype.itemsize

    # Sublane packing: 8 rows/vreg for f32, 16 for bf16, 32 for int8/fp8.
    sub = max(8, 32 // max(1, item))

    # M tile: cover the whole (aligned) batch when it is modest, so the memory
    # bank -- the dominant HBM stream -- is read exactly once.
    B_aligned = _round_up(B, sub)
    if tm is None:
        tm = B_aligned if B_aligned <= 1024 else 512
    tm = max(sub, _round_up(min(tm, B_aligned), sub))
    Bp = _round_up(B, tm)

    # N tile: lane-dense, divides the padded class dim.
    tn = _largest_dividing_tile(Cp, max(128, tn))

    # Keep >=2 steps on a parallel axis when possible (v7x has 2 TensorCores).
    if (Bp // tm) * (Cp // tn) < 2 and Cp >= 256:
        tn = _largest_dividing_tile(Cp, Cp // 2)

    cap = _vmem_cap_bytes()
    budget = int(0.7 * cap)

    # Single-pass (2-D grid, tk = Fp) whenever the feature dim fits VMEM.
    single_bytes = 2 * (tm * Fp + Fp * tn) * item + 2 * tm * tn * out_item
    single_pass = (tk is None or tk >= Fp) and single_bytes <= budget

    # Inputs: cast before padding (fewer bytes written); K padding value is
    # irrelevant because the bank's K padding is zero, but jnp.pad zeros anyway.
    x_p = inputs
    if x_p.dtype != compute_dtype:
        x_p = x_p.astype(compute_dtype)
    if (Bp, Fp) != (B, F):
        x_p = jnp.pad(x_p, ((0, Bp - B), (0, Fp - F)))

    if single_pass:
        grid = (Bp // tm, Cp // tn)
        kernel = functools.partial(_matmul_single_k_kernel, precision)
        w_spec_kwargs = {}
        if w_buffer_count is not None:
            # Deeper pipelining of the bank stream (useful on v7x).
            w_spec_kwargs = dict(pipeline_mode=pl.Buffered(int(w_buffer_count)))
        in_specs = [
            pl.BlockSpec((tm, Fp), lambda i, j: (i, 0)),
            pl.BlockSpec((Fp, tn), lambda i, j: (0, j), **w_spec_kwargs),
        ]
        out_specs = pl.BlockSpec((tm, tn), lambda i, j: (i, j))
        scratch_shapes = []
        semantics = ("parallel", "parallel")
        vmem_est = single_bytes
    else:
        tk_eff = _largest_dividing_tile(Fp, tk if tk is not None else 1024)
        grid = (Bp // tm, Cp // tn, Fp // tk_eff)
        in_specs = [
            pl.BlockSpec((tm, tk_eff), lambda i, j, k: (i, k)),
            pl.BlockSpec((tk_eff, tn), lambda i, j, k: (k, j)),
        ]
        out_specs = pl.BlockSpec((tm, tn), lambda i, j, k: (i, j))
        semantics = ("parallel", "parallel", "arbitrary")
        vmem_est = 2 * (tm * tk_eff + tk_eff * tn) * item + 2 * tm * tn * out_item
        if out_dtype == jnp.dtype(jnp.float32):
            kernel = functools.partial(_matmul_acc_out_kernel, precision)
            scratch_shapes = []
        else:
            kernel = functools.partial(_matmul_acc_scratch_kernel, precision)
            scratch_shapes = [pltpu.VMEM((tm, tn), jnp.float32)]
            vmem_est += tm * tn * 4

    # VMEM limit: derived from the actual chip (128 MiB on v5e/v6e, 64 MiB on
    # v7x) instead of a hard 64 MiB cap; never below the actual tile budget.
    vmem_limit = max(32 * 1024 * 1024, 2 * vmem_est)
    vmem_limit = min(vmem_limit, int(0.92 * cap))
    vmem_limit = max(vmem_limit, vmem_est + (2 << 20))
    vmem_limit = int(min(vmem_limit, cap))

    cost = pl.CostEstimate(
        flops=2 * B * C * F,
        transcendentals=0,
        bytes_accessed=(B * F * item + Fp * Cp * item + B * C * out_item),
    )

    out_p = pl.pallas_call(
        kernel,
        out_shape=jax.ShapeDtypeStruct((Bp, Cp), out_dtype),
        grid_spec=pltpu.PrefetchScalarGridSpec(
            num_scalar_prefetch=0,
            grid=grid,
            in_specs=in_specs,
            out_specs=out_specs,
            scratch_shapes=scratch_shapes,
        ),
        compiler_params=pltpu.CompilerParams(
            dimension_semantics=semantics,
            vmem_limit_bytes=vmem_limit,
        ),
        cost_estimate=cost,
    )(x_p, w_prepared)

    if (Bp, Cp) != (B, C):
        out_p = out_p[:B, :C]
    return out_p


def memory_forward(inputs, targets, mem, epoch=None, *, compute_dtype=None, **kwargs):
    """Drop-in analogue of Memory.forward: logits = inputs @ mem.T.

    `targets` / `epoch` (alpha) only drive the backward-pass EMA update of the
    memory bank in the PyTorch module, so they are unused here.  Prefer
    prepare_memory_bank() + memory_forward_prepared() in a real loop so the
    bank cast/transpose/pad happens once, not per call.
    """
    del targets, epoch  # backward-only in the PyTorch module
    w_prepared = prepare_memory_bank(mem, compute_dtype or inputs.dtype)
    return memory_forward_prepared(inputs, w_prepared, mem.shape[0], **kwargs)


if __name__ == "__main__":
    # Small shapes consistent with the module: batch=8, num_features=32,
    # num_classes=16 (padded internally to lane-dense 128-wide tiles).
    B, num_features, num_classes = 8, 32, 16

    key = jax.random.PRNGKey(0)
    k_x, k_mem, k_t = jax.random.split(key, 3)

    inputs = jax.random.normal(k_x, (B, num_features), dtype=jnp.float32)
    # nn.Parameter(torch.zeros(...)) in __init__; use deterministic
    # L2-normalized random rows so the output is non-trivial (the state the
    # memory bank reaches after updates).
    mem = jax.random.normal(k_mem, (num_classes, num_features), dtype=jnp.float32)
    mem = mem / jnp.linalg.norm(mem, axis=1, keepdims=True)
    targets = jax.random.randint(k_t, (1, B), 0, num_classes)
    epoch = 10  # alpha = 0.5 * epoch / 60 -- backward-only, unused in forward

    ref = inputs @ mem.T

    # Convenience path (prepares the bank per call, mirrors the PyTorch API).
    # Note: jnp.dot at default precision may use reduced-precision MXU passes;
    # tolerance relaxed accordingly (pass precision=lax.Precision.HIGHEST if
    # exactness vs. the f32 reference is required).
    logits = memory_forward(inputs, targets, mem, epoch=epoch)
    logits = jax.block_until_ready(logits)
    assert logits.shape == (B, num_classes)
    assert jnp.allclose(logits, ref, atol=1e-4, rtol=1e-4)

    # Production path: bank prepared ONCE (cast -> transpose -> pad hoisted out
    # of the per-call path), bf16 bank stream on the MXU, f32 accumulation.
    bank_bf16 = prepare_memory_bank(mem, jnp.bfloat16)
    logits_bf16 = memory_forward_prepared(
        inputs, bank_bf16, num_classes, out_dtype=jnp.float32)
    logits_bf16 = jax.block_until_ready(logits_bf16)
    assert logits_bf16.shape == (B, num_classes)
    assert jnp.allclose(logits_bf16, ref, atol=5e-2, rtol=5e-2)

    print("KERNEL_OK")
</pallas_src>

<mosaic_0001>
module attributes {stable_mosaic.version = 11 : i64} {
  func.func @_matmul_single_k_kernel(%arg0: i32, %arg1: i32, %arg2: memref<8x128xf32, #tpu.memory_space<vmem>>, %arg3: memref<128x128xf32, #tpu.memory_space<vmem>>, %arg4: memref<8x128xf32, #tpu.memory_space<vmem>>) attributes {dimension_semantics = [#tpu.dimension_semantics<parallel>, #tpu.dimension_semantics<parallel>], iteration_bounds = array<i64: 1, 1>, scalar_prefetch = 0 : i64, scratch_operands = 0 : i64, tpu.core_type = #tpu.core_type<tc>, window_params = [{transform_indices = @transform_0, window_bounds = array<i64: 8, 128>}, {transform_indices = @transform_1, window_bounds = array<i64: 128, 128>}, {transform_indices = @transform_2, window_bounds = array<i64: 8, 128>}]} {
    %c0 = arith.constant 0 : index
    %c0_0 = arith.constant 0 : index
    %0 = vector.load %arg2[%c0, %c0_0] : memref<8x128xf32, #tpu.memory_space<vmem>>, vector<8x128xf32>
    %c0_1 = arith.constant 0 : index
    %c0_2 = arith.constant 0 : index
    %1 = vector.load %arg3[%c0_1, %c0_2] : memref<128x128xf32, #tpu.memory_space<vmem>>, vector<128x128xf32>
    %cst = arith.constant dense<0.000000e+00> : vector<8x128xf32>
    %2 = tpu.matmul %0, %1, %cst {dimension_numbers = #tpu.dot_dimension_numbers<[1], [0], [0], [1], [0, 0, 1, 1], [], []>} : vector<8x128xf32>, vector<128x128xf32>, vector<8x128xf32> -> vector<8x128xf32>
    %c0_3 = arith.constant 0 : index
    %c0_4 = arith.constant 0 : index
    %3 = vector.load %arg4[%c0_3, %c0_4] : memref<8x128xf32, #tpu.memory_space<vmem>>, vector<8x128xf32>
    tpu.vector_store %arg4[%c0_3, %c0_4], %2 {strides = array<i32>} : memref<8x128xf32, #tpu.memory_space<vmem>>, vector<8x128xf32>,
    return
  }
  func.func @transform_0(%arg0: i32, %arg1: i32) -> (i32, i32) {
    %c0_i32 = arith.constant 0 : i32
    %c0_i32_0 = arith.constant 0 : i32
    return %arg0, %c0_i32 : i32, i32
  }
  func.func @transform_1(%arg0: i32, %arg1: i32) -> (i32, i32) {
    %c0_i32 = arith.constant 0 : i32
    %c0_i32_0 = arith.constant 0 : i32
    return %c0_i32, %arg1 : i32, i32
  }
  func.func @transform_2(%arg0: i32, %arg1: i32) -> (i32, i32) {
    %c0_i32 = arith.constant 0 : i32
    return %arg0, %arg1 : i32, i32
  }
}

</mosaic_0001>

<llo_original>
// kernel: tpu_custom_call.1
$region0: #{tpu_custom_call.1}
  #allocation0 [shape = 'u32[]', space=smem, size = 0x4, offset = 0x4, fixed_abs, tag = 'smem constant byte address 0x4 - core index']
  #allocation1 [shape = 'u32[144,128]{1,0:T(1,128)}', space=vmem, size = 0x12000, scoped, tag = 'internal scratch']
  %s0 = inlined_call_operand.hbm [shape: f32[8,128], index: 0, kind: input, shape index: {}]
  %s1 = inlined_call_operand.hbm [shape: f32[128,128], index: 1, kind: input, shape index: {}]
  %s2 = inlined_call_operand.hbm [shape: f32[8,128], index: 2, kind: output, shape index: {}]
  %s3 = sld [smem:[#allocation0]]
  $region26: #{tpu_custom_call.1} parent=0
    _
  %s5 = ssub.s32 1, %s3
  %s6 = scalar_select 0, %s5, %s3
  $region1: #{tpu_custom_call.1} parent=0
    #allocation2 [shape = 'u8[4096]{0}', space=vmem, size = 0x1000, scoped, tag = 'input window, operand 0, single buffered']
    #allocation3 [shape = 's32[1]{0}', space=sflag, size = 0x4, scoped, tag = 'scoped memory for tpu_custom_call.1']
    #allocation4 [shape = 's32[1]{0}', space=sflag, size = 0x4, scoped, tag = 'scoped memory for tpu_custom_call.1']
    #allocation5 [shape = 'u8[65536]{0}', space=vmem, size = 0x10000, scoped, tag = 'input window, operand 1, single buffered']
    #allocation6 [shape = 's32[1]{0}', space=sflag, size = 0x4, scoped, tag = 'scoped memory for tpu_custom_call.1']
    #allocation7 [shape = 'u8[4096]{0}', space=vmem, size = 0x1000, scoped, tag = 'output window, operand 0, single buffered']
    %7 = vsyncpa [#allocation3], 0
    %8 = vsyncpa [#allocation6], 0
    %9 = vsyncpa [#allocation4], 0
    // Predicated region
    $region2: #{tpu_custom_call.1} parent=1 // pred_check
      _
    $region3: #{tpu_custom_call.1} parent=1 // pred_check_branch
      %11 = sbr.rel (0) target = $region5
    $region4: #{tpu_custom_call.1} parent=1 // pred_region
      %s13 = ssub.s32 128, 128
      %14 = vsyncadd [#allocation3], %s13
      %s16 = sshll.u32 [#allocation2], 4
      %s17 = int_to_ptr.vmem [resolvable:$true] %s16
      %19 = dma.hbm_to_vmem [thread:$0]  %s0, 128, %s17, [#allocation3]
    $region5: #{tpu_custom_call.1} parent=1 // pred_fallthru
      _
    // Predicated region
    $region6: #{tpu_custom_call.1} parent=1 // pred_check
      _
    $region7: #{tpu_custom_call.1} parent=1 // pred_check_branch
      %21 = sbr.rel (0) target = $region9
    $region8: #{tpu_custom_call.1} parent=1 // pred_region
      %s23 = ssub.s32 2048, 2048
      %24 = vsyncadd [#allocation6], %s23
      %s25 = sshll.u32 [#allocation5], 4
      %s26 = int_to_ptr.vmem [resolvable:$true] %s25
      %31 = dma.hbm_to_vmem [thread:$0]  %s1, 2048, %s26, [#allocation6], 128, 128, 8
    $region9: #{tpu_custom_call.1} parent=1 // pred_fallthru
      _
    // Predicated region
    $region10: #{tpu_custom_call.1} parent=1 // pred_check
      _
    $region11: #{tpu_custom_call.1} parent=1 // pred_check_branch
      %33 = sbr.rel (0) target = $region13
    $region12: #{tpu_custom_call.1} parent=1 // pred_region
      %34 = dma.done [#allocation3], 128
    $region13: #{tpu_custom_call.1} parent=1 // pred_fallthru
      _
    // Predicated region
    $region14: #{tpu_custom_call.1} parent=1 // pred_check
      _
    $region15: #{tpu_custom_call.1} parent=1 // pred_check_branch
      %36 = sbr.rel (0) target = $region17
    $region16: #{tpu_custom_call.1} parent=1 // pred_region
      %37 = dma.done [#allocation6], 2048
    $region17: #{tpu_custom_call.1} parent=1 // pred_fallthru
      _
    %v38 = vld [vmem:[#allocation2] sm:$0xff]
    %v39 = vld [vmem:[#allocation5] sm:$0xff]
    %v40 = vld [vmem:[#allocation5 + $0x8] sm:$0xff]
    %v41 = vld [vmem:[#allocation5 + $0x10] sm:$0xff]
    %v42 = vld [vmem:[#allocation5 + $0x18] sm:$0xff]
    %v43 = vld [vmem:[#allocation5 + $0x20] sm:$0xff]
    %v44 = vld [vmem:[#allocation5 + $0x28] sm:$0xff]
    %v45 = vld [vmem:[#allocation5 + $0x30] sm:$0xff]
    %v46 = vld [vmem:[#allocation5 + $0x38] sm:$0xff]
    %v47 = vld [vmem:[#allocation5 + $0x40] sm:$0xff]
    %v48 = vld [vmem:[#allocation5 + $0x48] sm:$0xff]
    %v49 = vld [vmem:[#allocation5 + $0x50] sm:$0xff]
    %v50 = vld [vmem:[#allocation5 + $0x58] sm:$0xff]
    %v51 = vld [vmem:[#allocation5 + $0x60] sm:$0xff]
    %v52 = vld [vmem:[#allocation5 + $0x68] sm:$0xff]
    %v53 = vld [vmem:[#allocation5 + $0x70] sm:$0xff]
    %v54 = vld [vmem:[#allocation5 + $0x78] sm:$0xff]
    %55 = vmatprep.subr.mxu0 0.0
    %56 = vmatpush1.msra.mxu0 %v39
    %57 = vmatprep.subr.mxu0 0.0
    %58 = vmatpush1.msra.mxu0 %v40
    %59 = vmatprep.subr.mxu0 0.0
    %60 = vmatpush1.msra.mxu0 %v41
    %61 = vmatprep.subr.mxu0 0.0
    %62 = vmatpush1.msra.mxu0 %v42
    %63 = vmatprep.subr.mxu0 0.0
    %64 = vmatpush1.msra.mxu0 %v43
    %65 = vmatprep.subr.mxu0 0.0
    %66 = vmatpush1.msra.mxu0 %v44
    %67 = vmatprep.subr.mxu0 0.0
    %68 = vmatpush1.msra.mxu0 %v45
    %69 = vmatprep.subr.mxu0 0.0
    %70 = vmatpush1.msra.mxu0 %v46
    %71 = vmatprep.subr.mxu0 0.0
    %72 = vmatpush1.msra.mxu0 %v47
    %73 = vmatprep.subr.mxu0 0.0
    %74 = vmatpush1.msra.mxu0 %v48
    %75 = vmatprep.subr.mxu0 0.0
    %76 = vmatpush1.msra.mxu0 %v49
    %77 = vmatprep.subr.mxu0 0.0
    %78 = vmatpush1.msra.mxu0 %v50
    %79 = vmatprep.subr.mxu0 0.0
    %80 = vmatpush1.msra.mxu0 %v51
    %81 = vmatprep.subr.mxu0 0.0
    %82 = vmatpush1.msra.mxu0 %v52
    %83 = vmatprep.subr.mxu0 0.0
    %84 = vmatpush1.msra.mxu0 %v53
    %85 = vmatprep.subr.mxu0 0.0
    %86 = vmatpush1.msra.mxu0 %v54
    %87 = vmatprep.subr.mxu0 0.0
    %88 = vmatpush1.msra.mxu0 0.0
    %89 = vmatprep.subr.mxu0 0.0
    %90 = vmatpush1.msra.mxu0 0.0
    %91 = vmatprep.subr.mxu0 0.0
    %92 = vmatpush1.msra.mxu0 0.0
    %93 = vmatprep.subr.mxu0 0.0
    %94 = vmatpush1.msra.mxu0 0.0
    %95 = vmatprep.subr.mxu0 0.0
    %96 = vmatpush1.msra.mxu0 0.0
    %97 = vmatprep.subr.mxu0 0.0
    %98 = vmatpush1.msra.mxu0 0.0
    %99 = vmatprep.subr.mxu0 0.0
    %100 = vmatpush1.msra.mxu0 0.0
    %101 = vmatprep.subr.mxu0 0.0
    %102 = vmatpush1.msra.mxu0 0.0
    %103 = vmatprep.subr.mxu0 0.0
    %104 = vmatpush1.msra.mxu0 0.0
    %105 = vmatprep.subr.mxu0 0.0
    %106 = vmatpush1.msra.mxu0 0.0
    %107 = vmatprep.subr.mxu0 0.0
    %108 = vmatpush1.msra.mxu0 0.0
    %109 = vmatprep.subr.mxu0 0.0
    %110 = vmatpush1.msra.mxu0 0.0
    %111 = vmatprep.subr.mxu0 0.0
    %112 = vmatpush1.msra.mxu0 0.0
    %113 = vmatprep.subr.mxu0 0.0
    %114 = vmatpush1.msra.mxu0 0.0
    %115 = vmatprep.subr.mxu0 0.0
    %116 = vmatpush1.msra.mxu0 0.0
    %117 = vmatprep.subr.mxu0 0.0
    %118 = vmatpush1.msra.mxu0 0.0
    %119 = vmatprep.mubr.f32.mxu0 0.0
    %120 = vmatmul.mubr.f32.gmra.mrb[0].mxu0 %v38
    %v121 = vpop.f32.mrb[0].mxu0
    %v122 = vadd.f32 0.0, %v121
    %v123 = vpop.f32.mrb[0].mxu0
    %124 = vdwg.mxu0
    %125 = vst [vmem:[#allocation7] sm:$0xff] %v122
    // Predicated region
    $region18: #{tpu_custom_call.1} parent=1 // pred_check
      _
    $region19: #{tpu_custom_call.1} parent=1 // pred_check_branch
      %127 = sbr.rel (0) target = $region21
    $region20: #{tpu_custom_call.1} parent=1 // pred_region
      %s129 = ssub.s32 128, 128
      %130 = vsyncadd [#allocation4], %s129
      %s132 = sshll.u32 [#allocation7], 4
      %s133 = int_to_ptr.vmem [resolvable:$true] %s132
      %135 = dma.vmem_to_hbm [thread:$0]  %s133, 128, %s2, [#allocation4]
    $region21: #{tpu_custom_call.1} parent=1 // pred_fallthru
      _
    // Predicated region
    $region22: #{tpu_custom_call.1} parent=1 // pred_check
      _
    $region23: #{tpu_custom_call.1} parent=1 // pred_check_branch
      %137 = sbr.rel (0) target = $region25
    $region24: #{tpu_custom_call.1} parent=1 // pred_region
      %138 = dma.done [#allocation4], 128
    $region25: #{tpu_custom_call.1} parent=1 // pred_fallthru
      _
    %139 = vsyncpa [#allocation3], 1
    %140 = vsyncpa [#allocation6], 1
    %141 = vsyncpa [#allocation4], 1

</llo_original>
